<compile_context>
chip_gen: v7x
topology: tpu7x:2x2x1
jax: 0.10.0
libtpu: 0.0.40
codegen_flags: <defaults>
</compile_context>

<pallas_src>
import jax
import jax.numpy as jnp
from jax.experimental import pallas as pl
from jax.experimental.pallas import tpu as pltpu

# --- DAC static config (non-learnable hyper-parameters, baked into the wrapper) ---
V_PP = 2.0
PP_CONST = 4.0
CLAMP_MIN = -0.5
CLAMP_MAX = 0.5

_LANE_WIDTH = 2048               # lanes per row: large multiple of 128 -> unmasked stores
_TARGET_BLOCK_BYTES = 2 << 20    # ~2 MiB f32 block per grid step (past the roofline knee)


def _dac_kernel(params_ref, x_ref, o_ref):
    """Elementwise DAC hot path on a dense (row_tile, LANES) f32 slab.

    params_ref: (4,) f32 in SMEM = [scale(=norm*v_pp), clamp_lo*v_pp, clamp_hi*v_pp, v_bias]
    x_ref, o_ref: (row_tile, LANES) f32 tiles in VMEM.

    out = clip(x * (norm*v_pp), v_pp*clamp_min, v_pp*clamp_max) + v_bias
        = v_pp * clip(x * norm, clamp_min, clamp_max) + v_bias      (v_pp folded on host)
    # lpf = AllPassFilter -> identity
    """
    scale = params_ref[0]
    lo = params_ref[1]
    hi = params_ref[2]
    bias = params_ref[3]
    o_ref[...] = jnp.clip(x_ref[...] * scale, lo, hi) + bias


def dac_forward(x, normalization, v_bias, *,
                lane_width=_LANE_WIDTH, target_block_bytes=_TARGET_BLOCK_BYTES):
    """x: any-shaped float array. normalization, v_bias: scalar parameters."""
    orig_shape = x.shape
    x = jnp.asarray(x, jnp.float32)
    n = x.size
    w = lane_width

    # Rows needed at `w` lanes per row, rounded up to a multiple of 8 (f32 sublane tile).
    rows = -(-n // w)
    rows = -(-rows // 8) * 8
    # Row tile sized from the target block bytes (multiple of 8), shrunk for small inputs.
    row_tile = max(8, (target_block_bytes // (w * 4)) // 8 * 8)
    row_tile = min(row_tile, rows)
    # Pad row count to a multiple of row_tile so every grid block is full (no masked tail).
    rows = -(-rows // row_tile) * row_tile
    n_pad = rows * w

    x_flat = jnp.ravel(x)
    if n_pad != n:
        x_flat = jnp.pad(x_flat, (0, n_pad - n))
    x2d = x_flat.reshape(rows, w)

    # Fold v_pp into the scalar parameters (valid for any sign of v_pp since the
    # bounds are re-sorted; here v_pp = 2.0 > 0).
    v_pp = float(V_PP)
    b0, b1 = CLAMP_MIN * v_pp, CLAMP_MAX * v_pp
    lo, hi = (b0, b1) if b0 <= b1 else (b1, b0)
    scale = jnp.asarray(normalization, jnp.float32) * jnp.float32(v_pp)
    params = jnp.stack([scale,
                        jnp.float32(lo),
                        jnp.float32(hi),
                        jnp.asarray(v_bias, jnp.float32)])

    grid = (rows // row_tile,)
    block_bytes = row_tile * w * 4
    # Double-buffered input + output blocks, plus headroom; stay well under v7x's 64 MiB.
    needed = 4 * block_bytes
    vmem_limit = min(max(2 * needed, 16 * 1024 * 1024), 48 * 1024 * 1024)

    out2d = pl.pallas_call(
        _dac_kernel,
        out_shape=jax.ShapeDtypeStruct((rows, w), jnp.float32),
        grid_spec=pl.GridSpec(
            grid=grid,
            in_specs=[
                pl.BlockSpec(memory_space=pltpu.SMEM),            # [scale, lo, hi, bias]
                pl.BlockSpec((row_tile, w), lambda i: (i, 0)),    # x slab tile
            ],
            out_specs=pl.BlockSpec((row_tile, w), lambda i: (i, 0)),
        ),
        compiler_params=pltpu.CompilerParams(
            dimension_semantics=("parallel",),   # lets v7x shard rows across its 2 TCs
            vmem_limit_bytes=vmem_limit,
        ),
    )(params, x2d)

    return out2d.reshape(-1)[:n].reshape(orig_shape)


def dac_forward_ref(x, normalization, v_bias):
    """Pure-JAX reference mirroring the PyTorch forward()."""
    x = jnp.asarray(x, jnp.float32)
    v = V_PP * jnp.clip(x * normalization, CLAMP_MIN, CLAMP_MAX)
    v_lp = v  # AllPassFilter
    return v_lp + v_bias


if __name__ == "__main__":
    key = jax.random.PRNGKey(0)
    # Small, non-tile-aligned time axis to exercise the pad/unpad path.
    B, T = 2, 1000
    # Scale the input so that clamping actually engages for some samples.
    x = 3.0 * jax.random.normal(key, (B, T), dtype=jnp.float32)

    # Deterministic parameter init, exactly as __init__ does:
    normalization = 1.0 / PP_CONST      # pp_const is a float -> norm_init = 1/pp_const
    v_bias = -V_PP / 2.0                # bias_voltage == 'negative_vpp'

    out = dac_forward(x, normalization, v_bias)
    out = jax.block_until_ready(out)

    ref = dac_forward_ref(x, normalization, v_bias)
    assert out.shape == x.shape and out.dtype == jnp.float32
    assert jnp.allclose(out, ref, atol=1e-6, rtol=1e-6), "mismatch vs reference"

    print("KERNEL_OK")
</pallas_src>

<mosaic_0001>
module attributes {stable_mosaic.version = 11 : i64} {
  func.func @_dac_kernel(%arg0: i32, %arg1: memref<4xf32, #tpu.memory_space<smem>>, %arg2: memref<8x2048xf32, #tpu.memory_space<vmem>>, %arg3: memref<8x2048xf32, #tpu.memory_space<vmem>>) attributes {dimension_semantics = [#tpu.dimension_semantics<parallel>], iteration_bounds = array<i64: 1>, scalar_prefetch = 0 : i64, scratch_operands = 0 : i64, tpu.core_type = #tpu.core_type<tc>, window_params = [{transform_indices = @transform_0, window_bounds = array<i64: 4>}, {transform_indices = @transform_1, window_bounds = array<i64: 8, 2048>}, {transform_indices = @transform_2, window_bounds = array<i64: 8, 2048>}]} {
    %c0 = arith.constant 0 : index
    %0 = memref.load %arg1[%c0] : memref<4xf32, #tpu.memory_space<smem>>
    %c1 = arith.constant 1 : index
    %1 = memref.load %arg1[%c1] : memref<4xf32, #tpu.memory_space<smem>>
    %c2 = arith.constant 2 : index
    %2 = memref.load %arg1[%c2] : memref<4xf32, #tpu.memory_space<smem>>
    %c3 = arith.constant 3 : index
    %3 = memref.load %arg1[%c3] : memref<4xf32, #tpu.memory_space<smem>>
    %c0_0 = arith.constant 0 : index
    %c0_1 = arith.constant 0 : index
    %4 = vector.load %arg2[%c0_0, %c0_1] : memref<8x2048xf32, #tpu.memory_space<vmem>>, vector<8x2048xf32>
    %5 = vector.broadcast %0 : f32 to vector<8x2048xf32>
    %6 = arith.mulf %4, %5 : vector<8x2048xf32>
    %7 = vector.broadcast %1 : f32 to vector<8x2048xf32>
    %8 = arith.maximumf %7, %6 : vector<8x2048xf32>
    %9 = vector.broadcast %2 : f32 to vector<8x2048xf32>
    %10 = arith.minimumf %9, %8 : vector<8x2048xf32>
    %11 = vector.broadcast %3 : f32 to vector<8x2048xf32>
    %12 = arith.addf %10, %11 : vector<8x2048xf32>
    %c0_2 = arith.constant 0 : index
    %c0_3 = arith.constant 0 : index
    %13 = vector.load %arg3[%c0_2, %c0_3] : memref<8x2048xf32, #tpu.memory_space<vmem>>, vector<8x2048xf32>
    tpu.vector_store %arg3[%c0_2, %c0_3], %12 {strides = array<i32>} : memref<8x2048xf32, #tpu.memory_space<vmem>>, vector<8x2048xf32>,
    return
  }
  func.func @transform_0(%arg0: i32) -> i32 {
    %c0_i32 = arith.constant 0 : i32
    %c0_i32_0 = arith.constant 0 : i32
    return %c0_i32 : i32
  }
  func.func @transform_1(%arg0: i32) -> (i32, i32) {
    %c0_i32 = arith.constant 0 : i32
    %c0_i32_0 = arith.constant 0 : i32
    return %arg0, %c0_i32 : i32, i32
  }
  func.func @transform_2(%arg0: i32) -> (i32, i32) {
    %c0_i32 = arith.constant 0 : i32
    %c0_i32_0 = arith.constant 0 : i32
    return %arg0, %c0_i32 : i32, i32
  }
}

</mosaic_0001>

<llo_original>
// kernel: tpu_custom_call.1
$region0: #{tpu_custom_call.1}
  #allocation0 [shape = 'u32[]', space=smem, size = 0x4, offset = 0x4, fixed_abs, tag = 'smem constant byte address 0x4 - core index']
  #allocation1 [shape = 'u32[144,128]{1,0:T(1,128)}', space=vmem, size = 0x12000, scoped, tag = 'internal scratch']
  %s0 = inlined_call_operand.hbm [shape: f32[4], index: 0, kind: input, shape index: {}]
  %s1 = inlined_call_operand.hbm [shape: f32[8,2048], index: 1, kind: input, shape index: {}]
  %s2 = inlined_call_operand.hbm [shape: f32[8,2048], index: 2, kind: output, shape index: {}]
  %s3 = sld [smem:[#allocation0]]
  $region26: #{tpu_custom_call.1} parent=0
    _
  %s5 = ssub.s32 1, %s3
  %s6 = scalar_select 0, %s5, %s3
  $region1: #{tpu_custom_call.1} parent=0
    #allocation2 [shape = 'u8[512]{0}', space=smem, size = 0x200, scoped, tag = 'input window, operand 0, single buffered']
    #allocation3 [shape = 's32[1]{0}', space=sflag, size = 0x4, scoped, tag = 'scoped memory for tpu_custom_call.1']
    #allocation4 [shape = 's32[1]{0}', space=sflag, size = 0x4, scoped, tag = 'scoped memory for tpu_custom_call.1']
    #allocation5 [shape = 's32[1]{0}', space=sflag, size = 0x4, scoped, tag = 'scoped memory for tpu_custom_call.1']
    #allocation6 [shape = 'u8[65536]{0}', space=vmem, size = 0x10000, scoped, tag = 'input window, operand 1, single buffered']
    #allocation7 [shape = 'u8[65536]{0}', space=vmem, size = 0x10000, scoped, tag = 'output window, operand 0, single buffered']
    %7 = vsyncpa [#allocation5], 0
    %8 = vsyncpa [#allocation3], 0
    %9 = vsyncpa [#allocation4], 0
    // Predicated region
    $region2: #{tpu_custom_call.1} parent=1 // pred_check
      _
    $region3: #{tpu_custom_call.1} parent=1 // pred_check_branch
      %11 = sbr.rel (0) target = $region5
    $region4: #{tpu_custom_call.1} parent=1 // pred_region
      %s13 = ssub.s32 16, 16
      %14 = vsyncadd [#allocation5], %s13
      %17 = dma.hbm_to_smem %s0, 16, [#allocation2], [#allocation5]
    $region5: #{tpu_custom_call.1} parent=1 // pred_fallthru
      _
    // Predicated region
    $region6: #{tpu_custom_call.1} parent=1 // pred_check
      _
    $region7: #{tpu_custom_call.1} parent=1 // pred_check_branch
      %19 = sbr.rel (0) target = $region9
    $region8: #{tpu_custom_call.1} parent=1 // pred_region
      %s21 = ssub.s32 2048, 2048
      %22 = vsyncadd [#allocation3], %s21
      %s24 = sshll.u32 [#allocation6], 4
      %s25 = int_to_ptr.vmem [resolvable:$true] %s24
      %27 = dma.hbm_to_vmem [thread:$0]  %s1, 2048, %s25, [#allocation3]
    $region9: #{tpu_custom_call.1} parent=1 // pred_fallthru
      _
    // Predicated region
    $region10: #{tpu_custom_call.1} parent=1 // pred_check
      _
    $region11: #{tpu_custom_call.1} parent=1 // pred_check_branch
      %29 = sbr.rel (0) target = $region13
    $region12: #{tpu_custom_call.1} parent=1 // pred_region
      %30 = dma.done [#allocation5], 16
    $region13: #{tpu_custom_call.1} parent=1 // pred_fallthru
      _
    // Predicated region
    $region14: #{tpu_custom_call.1} parent=1 // pred_check
      _
    $region15: #{tpu_custom_call.1} parent=1 // pred_check_branch
      %32 = sbr.rel (0) target = $region17
    $region16: #{tpu_custom_call.1} parent=1 // pred_region
      %33 = dma.done [#allocation3], 2048
    $region17: #{tpu_custom_call.1} parent=1 // pred_fallthru
      _
    %34 = sfence
    %s35 = sld [smem:[#allocation2]]
    %s36 = sld [smem:[#allocation2 + $0x1]]
    %s37 = sld [smem:[#allocation2 + $0x2]]
    %s38 = sld [smem:[#allocation2 + $0x3]]
    %v39 = vld [vmem:[#allocation6] sm:$0xff]
    %v40 = vld [vmem:[#allocation6 + $0x8] sm:$0xff]
    %v41 = vld [vmem:[#allocation6 + $0x10] sm:$0xff]
    %v42 = vld [vmem:[#allocation6 + $0x18] sm:$0xff]
    %v43 = vld [vmem:[#allocation6 + $0x20] sm:$0xff]
    %v44 = vld [vmem:[#allocation6 + $0x28] sm:$0xff]
    %v45 = vld [vmem:[#allocation6 + $0x30] sm:$0xff]
    %v46 = vld [vmem:[#allocation6 + $0x38] sm:$0xff]
    %v47 = vld [vmem:[#allocation6 + $0x40] sm:$0xff]
    %v48 = vld [vmem:[#allocation6 + $0x48] sm:$0xff]
    %v49 = vld [vmem:[#allocation6 + $0x50] sm:$0xff]
    %v50 = vld [vmem:[#allocation6 + $0x58] sm:$0xff]
    %v51 = vld [vmem:[#allocation6 + $0x60] sm:$0xff]
    %v52 = vld [vmem:[#allocation6 + $0x68] sm:$0xff]
    %v53 = vld [vmem:[#allocation6 + $0x70] sm:$0xff]
    %v54 = vld [vmem:[#allocation6 + $0x78] sm:$0xff]
    %v55 = vstv %s35
    %v56 = vmul.f32 %v39, %v55
    %v57 = vmul.f32 %v40, %v55
    %v58 = vmul.f32 %v41, %v55
    %v59 = vmul.f32 %v42, %v55
    %v60 = vmul.f32 %v43, %v55
    %v61 = vmul.f32 %v44, %v55
    %v62 = vmul.f32 %v45, %v55
    %v63 = vmul.f32 %v46, %v55
    %v64 = vmul.f32 %v47, %v55
    %v65 = vmul.f32 %v48, %v55
    %v66 = vmul.f32 %v49, %v55
    %v67 = vmul.f32 %v50, %v55
    %v68 = vmul.f32 %v51, %v55
    %v69 = vmul.f32 %v52, %v55
    %v70 = vmul.f32 %v53, %v55
    %v71 = vmul.f32 %v54, %v55
    %v72 = vstv %s36
    %v73 = vmax.f32 %v72, %v56
    %v74 = vmax.f32 %v72, %v57
    %v75 = vmax.f32 %v72, %v58
    %v76 = vmax.f32 %v72, %v59
    %v77 = vmax.f32 %v72, %v60
    %v78 = vmax.f32 %v72, %v61
    %v79 = vmax.f32 %v72, %v62
    %v80 = vmax.f32 %v72, %v63
    %v81 = vmax.f32 %v72, %v64
    %v82 = vmax.f32 %v72, %v65
    %v83 = vmax.f32 %v72, %v66
    %v84 = vmax.f32 %v72, %v67
    %v85 = vmax.f32 %v72, %v68
    %v86 = vmax.f32 %v72, %v69
    %v87 = vmax.f32 %v72, %v70
    %v88 = vmax.f32 %v72, %v71
    %v89 = vstv %s37
    %v90 = vmin.f32 %v89, %v73
    %v91 = vmin.f32 %v89, %v74
    %v92 = vmin.f32 %v89, %v75
    %v93 = vmin.f32 %v89, %v76
    %v94 = vmin.f32 %v89, %v77
    %v95 = vmin.f32 %v89, %v78
    %v96 = vmin.f32 %v89, %v79
    %v97 = vmin.f32 %v89, %v80
    %v98 = vmin.f32 %v89, %v81
    %v99 = vmin.f32 %v89, %v82
    %v100 = vmin.f32 %v89, %v83
    %v101 = vmin.f32 %v89, %v84
    %v102 = vmin.f32 %v89, %v85
    %v103 = vmin.f32 %v89, %v86
    %v104 = vmin.f32 %v89, %v87
    %v105 = vmin.f32 %v89, %v88
    %v106 = vstv %s38
    %v107 = vadd.f32 %v90, %v106
    %v108 = vadd.f32 %v91, %v106
    %v109 = vadd.f32 %v92, %v106
    %v110 = vadd.f32 %v93, %v106
    %v111 = vadd.f32 %v94, %v106
    %v112 = vadd.f32 %v95, %v106
    %v113 = vadd.f32 %v96, %v106
    %v114 = vadd.f32 %v97, %v106
    %v115 = vadd.f32 %v98, %v106
    %v116 = vadd.f32 %v99, %v106
    %v117 = vadd.f32 %v100, %v106
    %v118 = vadd.f32 %v101, %v106
    %v119 = vadd.f32 %v102, %v106
    %v120 = vadd.f32 %v103, %v106
    %v121 = vadd.f32 %v104, %v106
    %v122 = vadd.f32 %v105, %v106
    %123 = vst [vmem:[#allocation7] sm:$0xff] %v107
    %124 = vst [vmem:[#allocation7 + $0x8] sm:$0xff] %v108
    %125 = vst [vmem:[#allocation7 + $0x10] sm:$0xff] %v109
    %126 = vst [vmem:[#allocation7 + $0x18] sm:$0xff] %v110
    %127 = vst [vmem:[#allocation7 + $0x20] sm:$0xff] %v111
    %128 = vst [vmem:[#allocation7 + $0x28] sm:$0xff] %v112
    %129 = vst [vmem:[#allocation7 + $0x30] sm:$0xff] %v113
    %130 = vst [vmem:[#allocation7 + $0x38] sm:$0xff] %v114
    %131 = vst [vmem:[#allocation7 + $0x40] sm:$0xff] %v115
    %132 = vst [vmem:[#allocation7 + $0x48] sm:$0xff] %v116
    %133 = vst [vmem:[#allocation7 + $0x50] sm:$0xff] %v117
    %134 = vst [vmem:[#allocation7 + $0x58] sm:$0xff] %v118
    %135 = vst [vmem:[#allocation7 + $0x60] sm:$0xff] %v119
    %136 = vst [vmem:[#allocation7 + $0x68] sm:$0xff] %v120
    %137 = vst [vmem:[#allocation7 + $0x70] sm:$0xff] %v121
    %138 = vst [vmem:[#allocation7 + $0x78] sm:$0xff] %v122
    // Predicated region
    $region18: #{tpu_custom_call.1} parent=1 // pred_check
      _
    $region19: #{tpu_custom_call.1} parent=1 // pred_check_branch
      %140 = sbr.rel (0) target = $region21
    $region20: #{tpu_custom_call.1} parent=1 // pred_region
      %s142 = ssub.s32 2048, 2048
      %143 = vsyncadd [#allocation4], %s142
      %s145 = sshll.u32 [#allocation7], 4
      %s146 = int_to_ptr.vmem [resolvable:$true] %s145
      %148 = dma.vmem_to_hbm [thread:$0]  %s146, 2048, %s2, [#allocation4]
    $region21: #{tpu_custom_call.1} parent=1 // pred_fallthru
      _
    // Predicated region
    $region22: #{tpu_custom_call.1} parent=1 // pred_check
      _
    $region23: #{tpu_custom_call.1} parent=1 // pred_check_branch
      %150 = sbr.rel (0) target = $region25
    $region24: #{tpu_custom_call.1} parent=1 // pred_region
      %151 = dma.done [#allocation4], 2048
    $region25: #{tpu_custom_call.1} parent=1 // pred_fallthru
      _
    %152 = vsyncpa [#allocation3], 1
    %153 = vsyncpa [#allocation4], 1
    %154 = vsyncpa [#allocation5], 1

</llo_original>
